<compile_context>
chip_gen: v6e
topology: v6e:2x2x1
jax: 0.10.0
libtpu: 0.0.40
codegen_flags: <defaults>
</compile_context>

<pallas_src>
import jax
import jax.numpy as jnp
from jax.experimental import pallas as pl
from jax.experimental.pallas import tpu as pltpu

_CHUNK = 8  # sublanes per inner chunk -> ~20 live vregs, no spills


def _sandwich_kernel(w1_ref, w2_ref, inp_ref, rays_ref, out_ref):
    # w1_ref:   (6, 12) f32 in SMEM (scalar-prefetched)   mlp1 weight (Cout, Cin)
    # w2_ref:   (3, 6)  f32 in SMEM (scalar-prefetched)   mlp2 weight (Cout, Cin)
    # inp_ref:  (1, 9, TS, 128)  channels = [albedo(3) | spec(3) | timefeature(3)]
    # rays_ref: (1, 6, TS, 128)
    # out_ref:  (1, 3, TS, 128)
    f32 = jnp.float32
    ts = inp_ref.shape[2]
    n_chunks = ts // _CHUNK

    # Hoist the 90 weight scalars out of the pixel loop (cheap sld, reused).
    w1 = [[w1_ref[co, ci] for ci in range(12)] for co in range(6)]
    w2 = [[w2_ref[co, ci] for ci in range(6)] for co in range(3)]

    @pl.loop(0, n_chunks)
    def _(step):
        r = pl.multiple_of(step * _CHUNK, _CHUNK)
        sl = pl.ds(r, _CHUNK)

        # 12 specular-MLP input channels for this chunk: spec, timefeature, rays.
        # Each is a lane-dense (8, 128) slab = 1 vreg.
        x = [inp_ref[0, 3 + c, sl, :].astype(f32) for c in range(6)]
        x += [rays_ref[0, c, sl, :].astype(f32) for c in range(6)]

        # mlp1 (1x1 conv 12->6) + ReLU as unrolled scalar-broadcast VPU FMAs.
        h = []
        for co in range(6):
            acc = x[0] * w1[co][0]
            for ci in range(1, 12):
                acc = acc + x[ci] * w1[co][ci]
            h.append(jnp.maximum(acc, 0.0))

        # mlp2 (1x1 conv 6->3); albedo residual folded into the accumulator init.
        for co in range(3):
            acc = inp_ref[0, co, sl, :].astype(f32)
            for ci in range(6):
                acc = acc + h[ci] * w2[co][ci]
            out_ref[0, co, sl, :] = acc.astype(out_ref.dtype)


def sandwich_noactss(inp, rays, w1, w2, *, max_ts=512):
    """inp: (N, 9, H, W), rays: (N, 6, H, W), w1: (6,12,1,1), w2: (3,6,1,1)."""
    N, C, H, W = inp.shape
    assert C == 9 and rays.shape == (N, 6, H, W)
    HW = H * W

    # Pixel tiling: S lane-groups of 128 pixels, TS sublane-groups per block.
    S = pl.cdiv(HW, 128)
    TS = min(max_ts, ((S + 7) // 8) * 8)           # multiple of 8 sublanes

    # Keep >= 4 total grid steps (>= 2 per TensorCore on v7x megacore) when the
    # pixel axis is big enough to split.
    total_steps = N * pl.cdiv(S, TS)
    if total_steps < 4:
        tiles_needed = -(-4 // N)                  # ceil(4 / N)
        ts_target = max(8, ((-(-S // tiles_needed) + 7) // 8) * 8)
        if ts_target < TS:
            TS = ts_target

    S_pad = pl.cdiv(S, TS) * TS
    P_pad = S_pad * 128

    def to_blocks(x):
        # (N, C, H, W) -> (N, C, S_pad, 128); pure reshape unless padding needed.
        x = x.reshape(N, x.shape[1], HW)
        if P_pad != HW:
            x = jnp.pad(x, ((0, 0), (0, 0), (0, P_pad - HW)))
        return x.reshape(N, x.shape[1], S_pad, 128)

    inp_b = to_blocks(inp)                          # (N, 9, S_pad, 128)
    rays_b = to_blocks(rays)                        # (N, 6, S_pad, 128)
    w1_m = w1[:, :, 0, 0].astype(jnp.float32)       # (6, 12)
    w2_m = w2[:, :, 0, 0].astype(jnp.float32)       # (3, 6)

    grid = (N, S_pad // TS)
    out_b = pl.pallas_call(
        _sandwich_kernel,
        out_shape=jax.ShapeDtypeStruct((N, 3, S_pad, 128), inp.dtype),
        grid_spec=pltpu.PrefetchScalarGridSpec(
            num_scalar_prefetch=2,                  # w1, w2 -> SMEM once
            grid=grid,
            in_specs=[
                pl.BlockSpec((1, 9, TS, 128), lambda n, s, w1r, w2r: (n, 0, s, 0)),
                pl.BlockSpec((1, 6, TS, 128), lambda n, s, w1r, w2r: (n, 0, s, 0)),
            ],
            out_specs=pl.BlockSpec((1, 3, TS, 128), lambda n, s, w1r, w2r: (n, 0, s, 0)),
        ),
        compiler_params=pltpu.CompilerParams(
            dimension_semantics=("parallel", "parallel"),
            # ~9 MiB of double-buffered blocks at TS=512; 48 MiB gives headroom
            # on every generation (incl. v7x's 64 MiB physical VMEM).
            vmem_limit_bytes=48 * 1024 * 1024,
        ),
    )(w1_m, w2_m, inp_b, rays_b)

    # (N, 3, S_pad, 128) -> (N, 3, H, W); padded tail pixels are discarded.
    return out_b.reshape(N, 3, P_pad)[:, :, :HW].reshape(N, 3, H, W)


def _reference(inp, rays, w1, w2):
    """Pure-JAX reference mirroring the PyTorch forward (f32 accumulation)."""
    hp = jax.lax.Precision.HIGHEST
    albedo = inp[:, 0:3]
    spec_cat = jnp.concatenate([inp[:, 3:6], inp[:, 6:9], rays], axis=1)
    w1m = w1[:, :, 0, 0]                            # (6, 12)
    w2m = w2[:, :, 0, 0]                            # (3, 6)
    h = jnp.einsum("nchw,oc->nohw", spec_cat, w1m, precision=hp)
    h = jnp.maximum(h, 0.0)
    s = jnp.einsum("nchw,oc->nohw", h, w2m, precision=hp)
    return albedo + s


if __name__ == "__main__":
    key = jax.random.PRNGKey(0)
    k_in, k_rays, k_w1, k_w2 = jax.random.split(key, 4)

    N, H, W = 2, 16, 16
    inp = jax.random.normal(k_in, (N, 9, H, W), dtype=jnp.float32)
    rays = jax.random.normal(k_rays, (N, 6, H, W), dtype=jnp.float32)

    # deterministic "kaiming-ish" init for the two 1x1 conv weights
    w1 = jax.random.normal(k_w1, (6, 12, 1, 1), dtype=jnp.float32) * (1.0 / 12.0) ** 0.5
    w2 = jax.random.normal(k_w2, (3, 6, 1, 1), dtype=jnp.float32) * (1.0 / 6.0) ** 0.5

    out = sandwich_noactss(inp, rays, w1, w2)
    out = jax.block_until_ready(out)

    ref = _reference(inp, rays, w1, w2)
    assert out.shape == (N, 3, H, W)
    assert jnp.allclose(out, ref, atol=1e-4, rtol=1e-4), "mismatch vs reference"

    print("KERNEL_OK")
</pallas_src>

<mosaic_0001>
module attributes {stable_mosaic.version = 11 : i64} {
  func.func @_sandwich_kernel(%arg0: i32, %arg1: i32, %arg2: memref<6x12xf32, #tpu.memory_space<smem>>, %arg3: memref<3x6xf32, #tpu.memory_space<smem>>, %arg4: memref<1x9x8x128xf32, #tpu.memory_space<vmem>>, %arg5: memref<1x6x8x128xf32, #tpu.memory_space<vmem>>, %arg6: memref<1x3x8x128xf32, #tpu.memory_space<vmem>>) attributes {dimension_semantics = [#tpu.dimension_semantics<parallel>, #tpu.dimension_semantics<parallel>], iteration_bounds = array<i64: 2, 1>, scalar_prefetch = 2 : i64, scratch_operands = 0 : i64, tpu.core_type = #tpu.core_type<tc>, window_params = [{transform_indices = @transform_0, window_bounds = array<i64: 1, 9, 8, 128>}, {transform_indices = @transform_1, window_bounds = array<i64: 1, 6, 8, 128>}, {transform_indices = @transform_2, window_bounds = array<i64: 1, 3, 8, 128>}]} {
    %c0 = arith.constant 0 : index
    %c0_0 = arith.constant 0 : index
    %0 = memref.load %arg2[%c0, %c0_0] : memref<6x12xf32, #tpu.memory_space<smem>>
    %c0_1 = arith.constant 0 : index
    %c1 = arith.constant 1 : index
    %1 = memref.load %arg2[%c0_1, %c1] : memref<6x12xf32, #tpu.memory_space<smem>>
    %c0_2 = arith.constant 0 : index
    %c2 = arith.constant 2 : index
    %2 = memref.load %arg2[%c0_2, %c2] : memref<6x12xf32, #tpu.memory_space<smem>>
    %c0_3 = arith.constant 0 : index
    %c3 = arith.constant 3 : index
    %3 = memref.load %arg2[%c0_3, %c3] : memref<6x12xf32, #tpu.memory_space<smem>>
    %c0_4 = arith.constant 0 : index
    %c4 = arith.constant 4 : index
    %4 = memref.load %arg2[%c0_4, %c4] : memref<6x12xf32, #tpu.memory_space<smem>>
    %c0_5 = arith.constant 0 : index
    %c5 = arith.constant 5 : index
    %5 = memref.load %arg2[%c0_5, %c5] : memref<6x12xf32, #tpu.memory_space<smem>>
    %c0_6 = arith.constant 0 : index
    %c6 = arith.constant 6 : index
    %6 = memref.load %arg2[%c0_6, %c6] : memref<6x12xf32, #tpu.memory_space<smem>>
    %c0_7 = arith.constant 0 : index
    %c7 = arith.constant 7 : index
    %7 = memref.load %arg2[%c0_7, %c7] : memref<6x12xf32, #tpu.memory_space<smem>>
    %c0_8 = arith.constant 0 : index
    %c8 = arith.constant 8 : index
    %8 = memref.load %arg2[%c0_8, %c8] : memref<6x12xf32, #tpu.memory_space<smem>>
    %c0_9 = arith.constant 0 : index
    %c9 = arith.constant 9 : index
    %9 = memref.load %arg2[%c0_9, %c9] : memref<6x12xf32, #tpu.memory_space<smem>>
    %c0_10 = arith.constant 0 : index
    %c10 = arith.constant 10 : index
    %10 = memref.load %arg2[%c0_10, %c10] : memref<6x12xf32, #tpu.memory_space<smem>>
    %c0_11 = arith.constant 0 : index
    %c11 = arith.constant 11 : index
    %11 = memref.load %arg2[%c0_11, %c11] : memref<6x12xf32, #tpu.memory_space<smem>>
    %c1_12 = arith.constant 1 : index
    %c0_13 = arith.constant 0 : index
    %12 = memref.load %arg2[%c1_12, %c0_13] : memref<6x12xf32, #tpu.memory_space<smem>>
    %c1_14 = arith.constant 1 : index
    %c1_15 = arith.constant 1 : index
    %13 = memref.load %arg2[%c1_14, %c1_15] : memref<6x12xf32, #tpu.memory_space<smem>>
    %c1_16 = arith.constant 1 : index
    %c2_17 = arith.constant 2 : index
    %14 = memref.load %arg2[%c1_16, %c2_17] : memref<6x12xf32, #tpu.memory_space<smem>>
    %c1_18 = arith.constant 1 : index
    %c3_19 = arith.constant 3 : index
    %15 = memref.load %arg2[%c1_18, %c3_19] : memref<6x12xf32, #tpu.memory_space<smem>>
    %c1_20 = arith.constant 1 : index
    %c4_21 = arith.constant 4 : index
    %16 = memref.load %arg2[%c1_20, %c4_21] : memref<6x12xf32, #tpu.memory_space<smem>>
    %c1_22 = arith.constant 1 : index
    %c5_23 = arith.constant 5 : index
    %17 = memref.load %arg2[%c1_22, %c5_23] : memref<6x12xf32, #tpu.memory_space<smem>>
    %c1_24 = arith.constant 1 : index
    %c6_25 = arith.constant 6 : index
    %18 = memref.load %arg2[%c1_24, %c6_25] : memref<6x12xf32, #tpu.memory_space<smem>>
    %c1_26 = arith.constant 1 : index
    %c7_27 = arith.constant 7 : index
    %19 = memref.load %arg2[%c1_26, %c7_27] : memref<6x12xf32, #tpu.memory_space<smem>>
    %c1_28 = arith.constant 1 : index
    %c8_29 = arith.constant 8 : index
    %20 = memref.load %arg2[%c1_28, %c8_29] : memref<6x12xf32, #tpu.memory_space<smem>>
    %c1_30 = arith.constant 1 : index
    %c9_31 = arith.constant 9 : index
    %21 = memref.load %arg2[%c1_30, %c9_31] : memref<6x12xf32, #tpu.memory_space<smem>>
    %c1_32 = arith.constant 1 : index
    %c10_33 = arith.constant 10 : index
    %22 = memref.load %arg2[%c1_32, %c10_33] : memref<6x12xf32, #tpu.memory_space<smem>>
    %c1_34 = arith.constant 1 : index
    %c11_35 = arith.constant 11 : index
    %23 = memref.load %arg2[%c1_34, %c11_35] : memref<6x12xf32, #tpu.memory_space<smem>>
    %c2_36 = arith.constant 2 : index
    %c0_37 = arith.constant 0 : index
    %24 = memref.load %arg2[%c2_36, %c0_37] : memref<6x12xf32, #tpu.memory_space<smem>>
    %c2_38 = arith.constant 2 : index
    %c1_39 = arith.constant 1 : index
    %25 = memref.load %arg2[%c2_38, %c1_39] : memref<6x12xf32, #tpu.memory_space<smem>>
    %c2_40 = arith.constant 2 : index
    %c2_41 = arith.constant 2 : index
    %26 = memref.load %arg2[%c2_40, %c2_41] : memref<6x12xf32, #tpu.memory_space<smem>>
    %c2_42 = arith.constant 2 : index
    %c3_43 = arith.constant 3 : index
    %27 = memref.load %arg2[%c2_42, %c3_43] : memref<6x12xf32, #tpu.memory_space<smem>>
    %c2_44 = arith.constant 2 : index
    %c4_45 = arith.constant 4 : index
    %28 = memref.load %arg2[%c2_44, %c4_45] : memref<6x12xf32, #tpu.memory_space<smem>>
    %c2_46 = arith.constant 2 : index
    %c5_47 = arith.constant 5 : index
    %29 = memref.load %arg2[%c2_46, %c5_47] : memref<6x12xf32, #tpu.memory_space<smem>>
    %c2_48 = arith.constant 2 : index
    %c6_49 = arith.constant 6 : index
    %30 = memref.load %arg2[%c2_48, %c6_49] : memref<6x12xf32, #tpu.memory_space<smem>>
    %c2_50 = arith.constant 2 : index
    %c7_51 = arith.constant 7 : index
    %31 = memref.load %arg2[%c2_50, %c7_51] : memref<6x12xf32, #tpu.memory_space<smem>>
    %c2_52 = arith.constant 2 : index
    %c8_53 = arith.constant 8 : index
    %32 = memref.load %arg2[%c2_52, %c8_53] : memref<6x12xf32, #tpu.memory_space<smem>>
    %c2_54 = arith.constant 2 : index
    %c9_55 = arith.constant 9 : index
    %33 = memref.load %arg2[%c2_54, %c9_55] : memref<6x12xf32, #tpu.memory_space<smem>>
    %c2_56 = arith.constant 2 : index
    %c10_57 = arith.constant 10 : index
    %34 = memref.load %arg2[%c2_56, %c10_57] : memref<6x12xf32, #tpu.memory_space<smem>>
    %c2_58 = arith.constant 2 : index
    %c11_59 = arith.constant 11 : index
    %35 = memref.load %arg2[%c2_58, %c11_59] : memref<6x12xf32, #tpu.memory_space<smem>>
    %c3_60 = arith.constant 3 : index
    %c0_61 = arith.constant 0 : index
    %36 = memref.load %arg2[%c3_60, %c0_61] : memref<6x12xf32, #tpu.memory_space<smem>>
    %c3_62 = arith.constant 3 : index
    %c1_63 = arith.constant 1 : index
    %37 = memref.load %arg2[%c3_62, %c1_63] : memref<6x12xf32, #tpu.memory_space<smem>>
    %c3_64 = arith.constant 3 : index
    %c2_65 = arith.constant 2 : index
    %38 = memref.load %arg2[%c3_64, %c2_65] : memref<6x12xf32, #tpu.memory_space<smem>>
    %c3_66 = arith.constant 3 : index
    %c3_67 = arith.constant 3 : index
    %39 = memref.load %arg2[%c3_66, %c3_67] : memref<6x12xf32, #tpu.memory_space<smem>>
    %c3_68 = arith.constant 3 : index
    %c4_69 = arith.constant 4 : index
    %40 = memref.load %arg2[%c3_68, %c4_69] : memref<6x12xf32, #tpu.memory_space<smem>>
    %c3_70 = arith.constant 3 : index
    %c5_71 = arith.constant 5 : index
    %41 = memref.load %arg2[%c3_70, %c5_71] : memref<6x12xf32, #tpu.memory_space<smem>>
    %c3_72 = arith.constant 3 : index
    %c6_73 = arith.constant 6 : index
    %42 = memref.load %arg2[%c3_72, %c6_73] : memref<6x12xf32, #tpu.memory_space<smem>>
    %c3_74 = arith.constant 3 : index
    %c7_75 = arith.constant 7 : index
    %43 = memref.load %arg2[%c3_74, %c7_75] : memref<6x12xf32, #tpu.memory_space<smem>>
    %c3_76 = arith.constant 3 : index
    %c8_77 = arith.constant 8 : index
    %44 = memref.load %arg2[%c3_76, %c8_77] : memref<6x12xf32, #tpu.memory_space<smem>>
    %c3_78 = arith.constant 3 : index
    %c9_79 = arith.constant 9 : index
    %45 = memref.load %arg2[%c3_78, %c9_79] : memref<6x12xf32, #tpu.memory_space<smem>>
    %c3_80 = arith.constant 3 : index
    %c10_81 = arith.constant 10 : index
    %46 = memref.load %arg2[%c3_80, %c10_81] : memref<6x12xf32, #tpu.memory_space<smem>>
    %c3_82 = arith.constant 3 : index
    %c11_83 = arith.constant 11 : index
    %47 = memref.load %arg2[%c3_82, %c11_83] : memref<6x12xf32, #tpu.memory_space<smem>>
    %c4_84 = arith.constant 4 : index
    %c0_85 = arith.constant 0 : index
    %48 = memref.load %arg2[%c4_84, %c0_85] : memref<6x12xf32, #tpu.memory_space<smem>>
    %c4_86 = arith.constant 4 : index
    %c1_87 = arith.constant 1 : index
    %49 = memref.load %arg2[%c4_86, %c1_87] : memref<6x12xf32, #tpu.memory_space<smem>>
    %c4_88 = arith.constant 4 : index
    %c2_89 = arith.constant 2 : index
    %50 = memref.load %arg2[%c4_88, %c2_89] : memref<6x12xf32, #tpu.memory_space<smem>>
    %c4_90 = arith.constant 4 : index
    %c3_91 = arith.constant 3 : index
    %51 = memref.load %arg2[%c4_90, %c3_91] : memref<6x12xf32, #tpu.memory_space<smem>>
    %c4_92 = arith.constant 4 : index
    %c4_93 = arith.constant 4 : index
    %52 = memref.load %arg2[%c4_92, %c4_93] : memref<6x12xf32, #tpu.memory_space<smem>>
    %c4_94 = arith.constant 4 : index
    %c5_95 = arith.constant 5 : index
    %53 = memref.load %arg2[%c4_94, %c5_95] : memref<6x12xf32, #tpu.memory_space<smem>>
    %c4_96 = arith.constant 4 : index
    %c6_97 = arith.constant 6 : index
    %54 = memref.load %arg2[%c4_96, %c6_97] : memref<6x12xf32, #tpu.memory_space<smem>>
    %c4_98 = arith.constant 4 : index
    %c7_99 = arith.constant 7 : index
    %55 = memref.load %arg2[%c4_98, %c7_99] : memref<6x12xf32, #tpu.memory_space<smem>>
    %c4_100 = arith.constant 4 : index
    %c8_101 = arith.constant 8 : index
    %56 = memref.load %arg2[%c4_100, %c8_101] : memref<6x12xf32, #tpu.memory_space<smem>>
    %c4_102 = arith.constant 4 : index
    %c9_103 = arith.constant 9 : index
    %57 = memref.load %arg2[%c4_102, %c9_103] : memref<6x12xf32, #tpu.memory_space<smem>>
    %c4_104 = arith.constant 4 : index
    %c10_105 = arith.constant 10 : index
    %58 = memref.load %arg2[%c4_104, %c10_105] : memref<6x12xf32, #tpu.memory_space<smem>>
    %c4_106 = arith.constant 4 : index
    %c11_107 = arith.constant 11 : index
    %59 = memref.load %arg2[%c4_106, %c11_107] : memref<6x12xf32, #tpu.memory_space<smem>>
    %c5_108 = arith.constant 5 : index
    %c0_109 = arith.constant 0 : index
    %60 = memref.load %arg2[%c5_108, %c0_109] : memref<6x12xf32, #tpu.memory_space<smem>>
    %c5_110 = arith.constant 5 : index
    %c1_111 = arith.constant 1 : index
    %61 = memref.load %arg2[%c5_110, %c1_111] : memref<6x12xf32, #tpu.memory_space<smem>>
    %c5_112 = arith.constant 5 : index
    %c2_113 = arith.constant 2 : index
    %62 = memref.load %arg2[%c5_112, %c2_113] : memref<6x12xf32, #tpu.memory_space<smem>>
    %c5_114 = arith.constant 5 : index
    %c3_115 = arith.constant 3 : index
    %63 = memref.load %arg2[%c5_114, %c3_115] : memref<6x12xf32, #tpu.memory_space<smem>>
    %c5_116 = arith.constant 5 : index
    %c4_117 = arith.constant 4 : index
    %64 = memref.load %arg2[%c5_116, %c4_117] : memref<6x12xf32, #tpu.memory_space<smem>>
    %c5_118 = arith.constant 5 : index
    %c5_119 = arith.constant 5 : index
    %65 = memref.load %arg2[%c5_118, %c5_119] : memref<6x12xf32, #tpu.memory_space<smem>>
    %c5_120 = arith.constant 5 : index
    %c6_121 = arith.constant 6 : index
    %66 = memref.load %arg2[%c5_120, %c6_121] : memref<6x12xf32, #tpu.memory_space<smem>>
    %c5_122 = arith.constant 5 : index
    %c7_123 = arith.constant 7 : index
    %67 = memref.load %arg2[%c5_122, %c7_123] : memref<6x12xf32, #tpu.memory_space<smem>>
    %c5_124 = arith.constant 5 : index
    %c8_125 = arith.constant 8 : index
    %68 = memref.load %arg2[%c5_124, %c8_125] : memref<6x12xf32, #tpu.memory_space<smem>>
    %c5_126 = arith.constant 5 : index
    %c9_127 = arith.constant 9 : index
    %69 = memref.load %arg2[%c5_126, %c9_127] : memref<6x12xf32, #tpu.memory_space<smem>>
    %c5_128 = arith.constant 5 : index
    %c10_129 = arith.constant 10 : index
    %70 = memref.load %arg2[%c5_128, %c10_129] : memref<6x12xf32, #tpu.memory_space<smem>>
    %c5_130 = arith.constant 5 : index
    %c11_131 = arith.constant 11 : index
    %71 = memref.load %arg2[%c5_130, %c11_131] : memref<6x12xf32, #tpu.memory_space<smem>>
    %c0_132 = arith.constant 0 : index
    %c0_133 = arith.constant 0 : index
    %72 = memref.load %arg3[%c0_132, %c0_133] : memref<3x6xf32, #tpu.memory_space<smem>>
    %c0_134 = arith.constant 0 : index
    %c1_135 = arith.constant 1 : index
    %73 = memref.load %arg3[%c0_134, %c1_135] : memref<3x6xf32, #tpu.memory_space<smem>>
    %c0_136 = arith.constant 0 : index
    %c2_137 = arith.constant 2 : index
    %74 = memref.load %arg3[%c0_136, %c2_137] : memref<3x6xf32, #tpu.memory_space<smem>>
    %c0_138 = arith.constant 0 : index
    %c3_139 = arith.constant 3 : index
    %75 = memref.load %arg3[%c0_138, %c3_139] : memref<3x6xf32, #tpu.memory_space<smem>>
    %c0_140 = arith.constant 0 : index
    %c4_141 = arith.constant 4 : index
    %76 = memref.load %arg3[%c0_140, %c4_141] : memref<3x6xf32, #tpu.memory_space<smem>>
    %c0_142 = arith.constant 0 : index
    %c5_143 = arith.constant 5 : index
    %77 = memref.load %arg3[%c0_142, %c5_143] : memref<3x6xf32, #tpu.memory_space<smem>>
    %c1_144 = arith.constant 1 : index
    %c0_145 = arith.constant 0 : index
    %78 = memref.load %arg3[%c1_144, %c0_145] : memref<3x6xf32, #tpu.memory_space<smem>>
    %c1_146 = arith.constant 1 : index
    %c1_147 = arith.constant 1 : index
    %79 = memref.load %arg3[%c1_146, %c1_147] : memref<3x6xf32, #tpu.memory_space<smem>>
    %c1_148 = arith.constant 1 : index
    %c2_149 = arith.constant 2 : index
    %80 = memref.load %arg3[%c1_148, %c2_149] : memref<3x6xf32, #tpu.memory_space<smem>>
    %c1_150 = arith.constant 1 : index
    %c3_151 = arith.constant 3 : index
    %81 = memref.load %arg3[%c1_150, %c3_151] : memref<3x6xf32, #tpu.memory_space<smem>>
    %c1_152 = arith.constant 1 : index
    %c4_153 = arith.constant 4 : index
    %82 = memref.load %arg3[%c1_152, %c4_153] : memref<3x6xf32, #tpu.memory_space<smem>>
    %c1_154 = arith.constant 1 : index
    %c5_155 = arith.constant 5 : index
    %83 = memref.load %arg3[%c1_154, %c5_155] : memref<3x6xf32, #tpu.memory_space<smem>>
    %c2_156 = arith.constant 2 : index
    %c0_157 = arith.constant 0 : index
    %84 = memref.load %arg3[%c2_156, %c0_157] : memref<3x6xf32, #tpu.memory_space<smem>>
    %c2_158 = arith.constant 2 : index
    %c1_159 = arith.constant 1 : index
    %85 = memref.load %arg3[%c2_158, %c1_159] : memref<3x6xf32, #tpu.memory_space<smem>>
    %c2_160 = arith.constant 2 : index
    %c2_161 = arith.constant 2 : index
    %86 = memref.load %arg3[%c2_160, %c2_161] : memref<3x6xf32, #tpu.memory_space<smem>>
    %c2_162 = arith.constant 2 : index
    %c3_163 = arith.constant 3 : index
    %87 = memref.load %arg3[%c2_162, %c3_163] : memref<3x6xf32, #tpu.memory_space<smem>>
    %c2_164 = arith.constant 2 : index
    %c4_165 = arith.constant 4 : index
    %88 = memref.load %arg3[%c2_164, %c4_165] : memref<3x6xf32, #tpu.memory_space<smem>>
    %c2_166 = arith.constant 2 : index
    %c5_167 = arith.constant 5 : index
    %89 = memref.load %arg3[%c2_166, %c5_167] : memref<3x6xf32, #tpu.memory_space<smem>>
    %c0_i32 = arith.constant 0 : i32
    %c1_i32 = arith.constant 1 : i32
    %90 = arith.muli %c0_i32, %c1_i32 : i32
    %c0_i32_168 = arith.constant 0 : i32
    %91 = arith.addi %c0_i32_168, %90 : i32
    %c8_i32 = arith.constant 8 : i32
    %92 = arith.muli %91, %c8_i32 : i32
    %93 = tpu.assume_multiple %92, 8 : i32
    %c0_169 = arith.constant 0 : index
    %c3_170 = arith.constant 3 : index
    %94 = arith.index_cast %93 : i32 to index
    %c0_171 = arith.constant 0 : index
    %95 = vector.load %arg4[%c0_169, %c3_170, %94, %c0_171] : memref<1x9x8x128xf32, #tpu.memory_space<vmem>>, vector<1x1x8x128xf32>
    %96 = vector.shape_cast %95 : vector<1x1x8x128xf32> to vector<8x128xf32>
    %c0_172 = arith.constant 0 : index
    %c4_173 = arith.constant 4 : index
    %97 = arith.index_cast %93 : i32 to index
    %c0_174 = arith.constant 0 : index
    %98 = vector.load %arg4[%c0_172, %c4_173, %97, %c0_174] : memref<1x9x8x128xf32, #tpu.memory_space<vmem>>, vector<1x1x8x128xf32>
    %99 = vector.shape_cast %98 : vector<1x1x8x128xf32> to vector<8x128xf32>
    %c0_175 = arith.constant 0 : index
    %c5_176 = arith.constant 5 : index
    %100 = arith.index_cast %93 : i32 to index
    %c0_177 = arith.constant 0 : index
    %101 = vector.load %arg4[%c0_175, %c5_176, %100, %c0_177] : memref<1x9x8x128xf32, #tpu.memory_space<vmem>>, vector<1x1x8x128xf32>
    %102 = vector.shape_cast %101 : vector<1x1x8x128xf32> to vector<8x128xf32>
    %c0_178 = arith.constant 0 : index
    %c6_179 = arith.constant 6 : index
    %103 = arith.index_cast %93 : i32 to index
    %c0_180 = arith.constant 0 : index
    %104 = vector.load %arg4[%c0_178, %c6_179, %103, %c0_180] : memref<1x9x8x128xf32, #tpu.memory_space<vmem>>, vector<1x1x8x128xf32>
    %105 = vector.shape_cast %104 : vector<1x1x8x128xf32> to vector<8x128xf32>
    %c0_181 = arith.constant 0 : index
    %c7_182 = arith.constant 7 : index
    %106 = arith.index_cast %93 : i32 to index
    %c0_183 = arith.constant 0 : index
    %107 = vector.load %arg4[%c0_181, %c7_182, %106, %c0_183] : memref<1x9x8x128xf32, #tpu.memory_space<vmem>>, vector<1x1x8x128xf32>
    %108 = vector.shape_cast %107 : vector<1x1x8x128xf32> to vector<8x128xf32>
    %c0_184 = arith.constant 0 : index
    %c8_185 = arith.constant 8 : index
    %109 = arith.index_cast %93 : i32 to index
    %c0_186 = arith.constant 0 : index
    %110 = vector.load %arg4[%c0_184, %c8_185, %109, %c0_186] : memref<1x9x8x128xf32, #tpu.memory_space<vmem>>, vector<1x1x8x128xf32>
    %111 = vector.shape_cast %110 : vector<1x1x8x128xf32> to vector<8x128xf32>
    %c0_187 = arith.constant 0 : index
    %c0_188 = arith.constant 0 : index
    %112 = arith.index_cast %93 : i32 to index
    %c0_189 = arith.constant 0 : index
    %113 = vector.load %arg5[%c0_187, %c0_188, %112, %c0_189] : memref<1x6x8x128xf32, #tpu.memory_space<vmem>>, vector<1x1x8x128xf32>
    %114 = vector.shape_cast %113 : vector<1x1x8x128xf32> to vector<8x128xf32>
    %c0_190 = arith.constant 0 : index
    %c1_191 = arith.constant 1 : index
    %115 = arith.index_cast %93 : i32 to index
    %c0_192 = arith.constant 0 : index
    %116 = vector.load %arg5[%c0_190, %c1_191, %115, %c0_192] : memref<1x6x8x128xf32, #tpu.memory_space<vmem>>, vector<1x1x8x128xf32>
    %117 = vector.shape_cast %116 : vector<1x1x8x128xf32> to vector<8x128xf32>
    %c0_193 = arith.constant 0 : index
    %c2_194 = arith.constant 2 : index
    %118 = arith.index_cast %93 : i32 to index
    %c0_195 = arith.constant 0 : index
    %119 = vector.load %arg5[%c0_193, %c2_194, %118, %c0_195] : memref<1x6x8x128xf32, #tpu.memory_space<vmem>>, vector<1x1x8x128xf32>
    %120 = vector.shape_cast %119 : vector<1x1x8x128xf32> to vector<8x128xf32>
    %c0_196 = arith.constant 0 : index
    %c3_197 = arith.constant 3 : index
    %121 = arith.index_cast %93 : i32 to index
    %c0_198 = arith.constant 0 : index
    %122 = vector.load %arg5[%c0_196, %c3_197, %121, %c0_198] : memref<1x6x8x128xf32, #tpu.memory_space<vmem>>, vector<1x1x8x128xf32>
    %123 = vector.shape_cast %122 : vector<1x1x8x128xf32> to vector<8x128xf32>
    %c0_199 = arith.constant 0 : index
    %c4_200 = arith.constant 4 : index
    %124 = arith.index_cast %93 : i32 to index
    %c0_201 = arith.constant 0 : index
    %125 = vector.load %arg5[%c0_199, %c4_200, %124, %c0_201] : memref<1x6x8x128xf32, #tpu.memory_space<vmem>>, vector<1x1x8x128xf32>
    %126 = vector.shape_cast %125 : vector<1x1x8x128xf32> to vector<8x128xf32>
    %c0_202 = arith.constant 0 : index
    %c5_203 = arith.constant 5 : index
    %127 = arith.index_cast %93 : i32 to index
    %c0_204 = arith.constant 0 : index
    %128 = vector.load %arg5[%c0_202, %c5_203, %127, %c0_204] : memref<1x6x8x128xf32, #tpu.memory_space<vmem>>, vector<1x1x8x128xf32>
    %129 = vector.shape_cast %128 : vector<1x1x8x128xf32> to vector<8x128xf32>
    %130 = vector.broadcast %0 : f32 to vector<8x128xf32>
    %131 = arith.mulf %96, %130 : vector<8x128xf32>
    %132 = vector.broadcast %1 : f32 to vector<8x128xf32>
    %133 = arith.mulf %99, %132 : vector<8x128xf32>
    %134 = arith.addf %131, %133 : vector<8x128xf32>
    %135 = vector.broadcast %2 : f32 to vector<8x128xf32>
    %136 = arith.mulf %102, %135 : vector<8x128xf32>
    %137 = arith.addf %134, %136 : vector<8x128xf32>
    %138 = vector.broadcast %3 : f32 to vector<8x128xf32>
    %139 = arith.mulf %105, %138 : vector<8x128xf32>
    %140 = arith.addf %137, %139 : vector<8x128xf32>
    %141 = vector.broadcast %4 : f32 to vector<8x128xf32>
    %142 = arith.mulf %108, %141 : vector<8x128xf32>
    %143 = arith.addf %140, %142 : vector<8x128xf32>
    %144 = vector.broadcast %5 : f32 to vector<8x128xf32>
    %145 = arith.mulf %111, %144 : vector<8x128xf32>
    %146 = arith.addf %143, %145 : vector<8x128xf32>
    %147 = vector.broadcast %6 : f32 to vector<8x128xf32>
    %148 = arith.mulf %114, %147 : vector<8x128xf32>
    %149 = arith.addf %146, %148 : vector<8x128xf32>
    %150 = vector.broadcast %7 : f32 to vector<8x128xf32>
    %151 = arith.mulf %117, %150 : vector<8x128xf32>
    %152 = arith.addf %149, %151 : vector<8x128xf32>
    %153 = vector.broadcast %8 : f32 to vector<8x128xf32>
    %154 = arith.mulf %120, %153 : vector<8x128xf32>
    %155 = arith.addf %152, %154 : vector<8x128xf32>
    %156 = vector.broadcast %9 : f32 to vector<8x128xf32>
    %157 = arith.mulf %123, %156 : vector<8x128xf32>
    %158 = arith.addf %155, %157 : vector<8x128xf32>
    %159 = vector.broadcast %10 : f32 to vector<8x128xf32>
    %160 = arith.mulf %126, %159 : vector<8x128xf32>
    %161 = arith.addf %158, %160 : vector<8x128xf32>
    %162 = vector.broadcast %11 : f32 to vector<8x128xf32>
    %163 = arith.mulf %129, %162 : vector<8x128xf32>
    %164 = arith.addf %161, %163 : vector<8x128xf32>
    %cst = arith.constant 0.000000e+00 : f32
    %165 = vector.broadcast %cst : f32 to vector<8x128xf32>
    %166 = arith.maximumf %164, %165 : vector<8x128xf32>
    %167 = vector.broadcast %12 : f32 to vector<8x128xf32>
    %168 = arith.mulf %96, %167 : vector<8x128xf32>
    %169 = vector.broadcast %13 : f32 to vector<8x128xf32>
    %170 = arith.mulf %99, %169 : vector<8x128xf32>
    %171 = arith.addf %168, %170 : vector<8x128xf32>
    %172 = vector.broadcast %14 : f32 to vector<8x128xf32>
    %173 = arith.mulf %102, %172 : vector<8x128xf32>
    %174 = arith.addf %171, %173 : vector<8x128xf32>
    %175 = vector.broadcast %15 : f32 to vector<8x128xf32>
    %176 = arith.mulf %105, %175 : vector<8x128xf32>
    %177 = arith.addf %174, %176 : vector<8x128xf32>
    %178 = vector.broadcast %16 : f32 to vector<8x128xf32>
    %179 = arith.mulf %108, %178 : vector<8x128xf32>
    %180 = arith.addf %177, %179 : vector<8x128xf32>
    %181 = vector.broadcast %17 : f32 to vector<8x128xf32>
    %182 = arith.mulf %111, %181 : vector<8x128xf32>
    %183 = arith.addf %180, %182 : vector<8x128xf32>
    %184 = vector.broadcast %18 : f32 to vector<8x128xf32>
    %185 = arith.mulf %114, %184 : vector<8x128xf32>
    %186 = arith.addf %183, %185 : vector<8x128xf32>
    %187 = vector.broadcast %19 : f32 to vector<8x128xf32>
    %188 = arith.mulf %117, %187 : vector<8x128xf32>
    %189 = arith.addf %186, %188 : vector<8x128xf32>
    %190 = vector.broadcast %20 : f32 to vector<8x128xf32>
    %191 = arith.mulf %120, %190 : vector<8x128xf32>
    %192 = arith.addf %189, %191 : vector<8x128xf32>
    %193 = vector.broadcast %21 : f32 to vector<8x128xf32>
    %194 = arith.mulf %123, %193 : vector<8x128xf32>
    %195 = arith.addf %192, %194 : vector<8x128xf32>
    %196 = vector.broadcast %22 : f32 to vector<8x128xf32>
    %197 = arith.mulf %126, %196 : vector<8x128xf32>
    %198 = arith.addf %195, %197 : vector<8x128xf32>
    %199 = vector.broadcast %23 : f32 to vector<8x128xf32>
    %200 = arith.mulf %129, %199 : vector<8x128xf32>
    %201 = arith.addf %198, %200 : vector<8x128xf32>
    %cst_205 = arith.constant 0.000000e+00 : f32
    %202 = vector.broadcast %cst_205 : f32 to vector<8x128xf32>
    %203 = arith.maximumf %201, %202 : vector<8x128xf32>
    %204 = vector.broadcast %24 : f32 to vector<8x128xf32>
    %205 = arith.mulf %96, %204 : vector<8x128xf32>
    %206 = vector.broadcast %25 : f32 to vector<8x128xf32>
    %207 = arith.mulf %99, %206 : vector<8x128xf32>
    %208 = arith.addf %205, %207 : vector<8x128xf32>
    %209 = vector.broadcast %26 : f32 to vector<8x128xf32>
    %210 = arith.mulf %102, %209 : vector<8x128xf32>
    %211 = arith.addf %208, %210 : vector<8x128xf32>
    %212 = vector.broadcast %27 : f32 to vector<8x128xf32>
    %213 = arith.mulf %105, %212 : vector<8x128xf32>
    %214 = arith.addf %211, %213 : vector<8x128xf32>
    %215 = vector.broadcast %28 : f32 to vector<8x128xf32>
    %216 = arith.mulf %108, %215 : vector<8x128xf32>
    %217 = arith.addf %214, %216 : vector<8x128xf32>
    %218 = vector.broadcast %29 : f32 to vector<8x128xf32>
    %219 = arith.mulf %111, %218 : vector<8x128xf32>
    %220 = arith.addf %217, %219 : vector<8x128xf32>
    %221 = vector.broadcast %30 : f32 to vector<8x128xf32>
    %222 = arith.mulf %114, %221 : vector<8x128xf32>
    %223 = arith.addf %220, %222 : vector<8x128xf32>
    %224 = vector.broadcast %31 : f32 to vector<8x128xf32>
    %225 = arith.mulf %117, %224 : vector<8x128xf32>
    %226 = arith.addf %223, %225 : vector<8x128xf32>
    %227 = vector.broadcast %32 : f32 to vector<8x128xf32>
    %228 = arith.mulf %120, %227 : vector<8x128xf32>
    %229 = arith.addf %226, %228 : vector<8x128xf32>
    %230 = vector.broadcast %33 : f32 to vector<8x128xf32>
    %231 = arith.mulf %123, %230 : vector<8x128xf32>
    %232 = arith.addf %229, %231 : vector<8x128xf32>
    %233 = vector.broadcast %34 : f32 to vector<8x128xf32>
    %234 = arith.mulf %126, %233 : vector<8x128xf32>
    %235 = arith.addf %232, %234 : vector<8x128xf32>
    %236 = vector.broadcast %35 : f32 to vector<8x128xf32>
    %237 = arith.mulf %129, %236 : vector<8x128xf32>
    %238 = arith.addf %235, %237 : vector<8x128xf32>
    %cst_206 = arith.constant 0.000000e+00 : f32
    %239 = vector.broadcast %cst_206 : f32 to vector<8x128xf32>
    %240 = arith.maximumf %238, %239 : vector<8x128xf32>
    %241 = vector.broadcast %36 : f32 to vector<8x128xf32>
    %242 = arith.mulf %96, %241 : vector<8x128xf32>
    %243 = vector.broadcast %37 : f32 to vector<8x128xf32>
    %244 = arith.mulf %99, %243 : vector<8x128xf32>
    %245 = arith.addf %242, %244 : vector<8x128xf32>
    %246 = vector.broadcast %38 : f32 to vector<8x128xf32>
    %247 = arith.mulf %102, %246 : vector<8x128xf32>
    %248 = arith.addf %245, %247 : vector<8x128xf32>
    %249 = vector.broadcast %39 : f32 to vector<8x128xf32>
    %250 = arith.mulf %105, %249 : vector<8x128xf32>
    %251 = arith.addf %248, %250 : vector<8x128xf32>
    %252 = vector.broadcast %40 : f32 to vector<8x128xf32>
    %253 = arith.mulf %108, %252 : vector<8x128xf32>
    %254 = arith.addf %251, %253 : vector<8x128xf32>
    %255 = vector.broadcast %41 : f32 to vector<8x128xf32>
    %256 = arith.mulf %111, %255 : vector<8x128xf32>
    %257 = arith.addf %254, %256 : vector<8x128xf32>
    %258 = vector.broadcast %42 : f32 to vector<8x128xf32>
    %259 = arith.mulf %114, %258 : vector<8x128xf32>
    %260 = arith.addf %257, %259 : vector<8x128xf32>
    %261 = vector.broadcast %43 : f32 to vector<8x128xf32>
    %262 = arith.mulf %117, %261 : vector<8x128xf32>
    %263 = arith.addf %260, %262 : vector<8x128xf32>
    %264 = vector.broadcast %44 : f32 to vector<8x128xf32>
    %265 = arith.mulf %120, %264 : vector<8x128xf32>
    %266 = arith.addf %263, %265 : vector<8x128xf32>
    %267 = vector.broadcast %45 : f32 to vector<8x128xf32>
    %268 = arith.mulf %123, %267 : vector<8x128xf32>
    %269 = arith.addf %266, %268 : vector<8x128xf32>
    %270 = vector.broadcast %46 : f32 to vector<8x128xf32>
    %271 = arith.mulf %126, %270 : vector<8x128xf32>
    %272 = arith.addf %269, %271 : vector<8x128xf32>
    %273 = vector.broadcast %47 : f32 to vector<8x128xf32>
    %274 = arith.mulf %129, %273 : vector<8x128xf32>
    %275 = arith.addf %272, %274 : vector<8x128xf32>
    %cst_207 = arith.constant 0.000000e+00 : f32
    %276 = vector.broadcast %cst_207 : f32 to vector<8x128xf32>
    %277 = arith.maximumf %275, %276 : vector<8x128xf32>
    %278 = vector.broadcast %48 : f32 to vector<8x128xf32>
    %279 = arith.mulf %96, %278 : vector<8x128xf32>
    %280 = vector.broadcast %49 : f32 to vector<8x128xf32>
    %281 = arith.mulf %99, %280 : vector<8x128xf32>
    %282 = arith.addf %279, %281 : vector<8x128xf32>
    %283 = vector.broadcast %50 : f32 to vector<8x128xf32>
    %284 = arith.mulf %102, %283 : vector<8x128xf32>
    %285 = arith.addf %282, %284 : vector<8x128xf32>
    %286 = vector.broadcast %51 : f32 to vector<8x128xf32>
    %287 = arith.mulf %105, %286 : vector<8x128xf32>
    %288 = arith.addf %285, %287 : vector<8x128xf32>
    %289 = vector.broadcast %52 : f32 to vector<8x128xf32>
    %290 = arith.mulf %108, %289 : vector<8x128xf32>
    %291 = arith.addf %288, %290 : vector<8x128xf32>
    %292 = vector.broadcast %53 : f32 to vector<8x128xf32>
    %293 = arith.mulf %111, %292 : vector<8x128xf32>
    %294 = arith.addf %291, %293 : vector<8x128xf32>
    %295 = vector.broadcast %54 : f32 to vector<8x128xf32>
    %296 = arith.mulf %114, %295 : vector<8x128xf32>
    %297 = arith.addf %294, %296 : vector<8x128xf32>
    %298 = vector.broadcast %55 : f32 to vector<8x128xf32>
    %299 = arith.mulf %117, %298 : vector<8x128xf32>
    %300 = arith.addf %297, %299 : vector<8x128xf32>
    %301 = vector.broadcast %56 : f32 to vector<8x128xf32>
    %302 = arith.mulf %120, %301 : vector<8x128xf32>
    %303 = arith.addf %300, %302 : vector<8x128xf32>
    %304 = vector.broadcast %57 : f32 to vector<8x128xf32>
    %305 = arith.mulf %123, %304 : vector<8x128xf32>
    %306 = arith.addf %303, %305 : vector<8x128xf32>
    %307 = vector.broadcast %58 : f32 to vector<8x128xf32>
    %308 = arith.mulf %126, %307 : vector<8x128xf32>
    %309 = arith.addf %306, %308 : vector<8x128xf32>
    %310 = vector.broadcast %59 : f32 to vector<8x128xf32>
    %311 = arith.mulf %129, %310 : vector<8x128xf32>
    %312 = arith.addf %309, %311 : vector<8x128xf32>
    %cst_208 = arith.constant 0.000000e+00 : f32
    %313 = vector.broadcast %cst_208 : f32 to vector<8x128xf32>
    %314 = arith.maximumf %312, %313 : vector<8x128xf32>
    %315 = vector.broadcast %60 : f32 to vector<8x128xf32>
    %316 = arith.mulf %96, %315 : vector<8x128xf32>
    %317 = vector.broadcast %61 : f32 to vector<8x128xf32>
    %318 = arith.mulf %99, %317 : vector<8x128xf32>
    %319 = arith.addf %316, %318 : vector<8x128xf32>
    %320 = vector.broadcast %62 : f32 to vector<8x128xf32>
    %321 = arith.mulf %102, %320 : vector<8x128xf32>
    %322 = arith.addf %319, %321 : vector<8x128xf32>
    %323 = vector.broadcast %63 : f32 to vector<8x128xf32>
    %324 = arith.mulf %105, %323 : vector<8x128xf32>
    %325 = arith.addf %322, %324 : vector<8x128xf32>
    %326 = vector.broadcast %64 : f32 to vector<8x128xf32>
    %327 = arith.mulf %108, %326 : vector<8x128xf32>
    %328 = arith.addf %325, %327 : vector<8x128xf32>
    %329 = vector.broadcast %65 : f32 to vector<8x128xf32>
    %330 = arith.mulf %111, %329 : vector<8x128xf32>
    %331 = arith.addf %328, %330 : vector<8x128xf32>
    %332 = vector.broadcast %66 : f32 to vector<8x128xf32>
    %333 = arith.mulf %114, %332 : vector<8x128xf32>
    %334 = arith.addf %331, %333 : vector<8x128xf32>
    %335 = vector.broadcast %67 : f32 to vector<8x128xf32>
    %336 = arith.mulf %117, %335 : vector<8x128xf32>
    %337 = arith.addf %334, %336 : vector<8x128xf32>
    %338 = vector.broadcast %68 : f32 to vector<8x128xf32>
    %339 = arith.mulf %120, %338 : vector<8x128xf32>
    %340 = arith.addf %337, %339 : vector<8x128xf32>
    %341 = vector.broadcast %69 : f32 to vector<8x128xf32>
    %342 = arith.mulf %123, %341 : vector<8x128xf32>
    %343 = arith.addf %340, %342 : vector<8x128xf32>
    %344 = vector.broadcast %70 : f32 to vector<8x128xf32>
    %345 = arith.mulf %126, %344 : vector<8x128xf32>
    %346 = arith.addf %343, %345 : vector<8x128xf32>
    %347 = vector.broadcast %71 : f32 to vector<8x128xf32>
    %348 = arith.mulf %129, %347 : vector<8x128xf32>
    %349 = arith.addf %346, %348 : vector<8x128xf32>
    %cst_209 = arith.constant 0.000000e+00 : f32
    %350 = vector.broadcast %cst_209 : f32 to vector<8x128xf32>
    %351 = arith.maximumf %349, %350 : vector<8x128xf32>
    %c0_210 = arith.constant 0 : index
    %c0_211 = arith.constant 0 : index
    %352 = arith.index_cast %93 : i32 to index
    %c0_212 = arith.constant 0 : index
    %353 = vector.load %arg4[%c0_210, %c0_211, %352, %c0_212] : memref<1x9x8x128xf32, #tpu.memory_space<vmem>>, vector<1x1x8x128xf32>
    %354 = vector.shape_cast %353 : vector<1x1x8x128xf32> to vector<8x128xf32>
    %355 = vector.broadcast %72 : f32 to vector<8x128xf32>
    %356 = arith.mulf %166, %355 : vector<8x128xf32>
    %357 = arith.addf %354, %356 : vector<8x128xf32>
    %358 = vector.broadcast %73 : f32 to vector<8x128xf32>
    %359 = arith.mulf %203, %358 : vector<8x128xf32>
    %360 = arith.addf %357, %359 : vector<8x128xf32>
    %361 = vector.broadcast %74 : f32 to vector<8x128xf32>
    %362 = arith.mulf %240, %361 : vector<8x128xf32>
    %363 = arith.addf %360, %362 : vector<8x128xf32>
    %364 = vector.broadcast %75 : f32 to vector<8x128xf32>
    %365 = arith.mulf %277, %364 : vector<8x128xf32>
    %366 = arith.addf %363, %365 : vector<8x128xf32>
    %367 = vector.broadcast %76 : f32 to vector<8x128xf32>
    %368 = arith.mulf %314, %367 : vector<8x128xf32>
    %369 = arith.addf %366, %368 : vector<8x128xf32>
    %370 = vector.broadcast %77 : f32 to vector<8x128xf32>
    %371 = arith.mulf %351, %370 : vector<8x128xf32>
    %372 = arith.addf %369, %371 : vector<8x128xf32>
    %c0_213 = arith.constant 0 : index
    %c0_214 = arith.constant 0 : index
    %373 = arith.index_cast %93 : i32 to index
    %c0_215 = arith.constant 0 : index
    %374 = vector.load %arg6[%c0_213, %c0_214, %373, %c0_215] : memref<1x3x8x128xf32, #tpu.memory_space<vmem>>, vector<1x1x8x128xf32>
    %375 = vector.shape_cast %374 : vector<1x1x8x128xf32> to vector<8x128xf32>
    %376 = vector.shape_cast %372 : vector<8x128xf32> to vector<1x1x8x128xf32>
    tpu.vector_store %arg6[%c0_213, %c0_214, %373, %c0_215], %376 {strides = array<i32>} : memref<1x3x8x128xf32, #tpu.memory_space<vmem>>, vector<1x1x8x128xf32>,
    %c0_216 = arith.constant 0 : index
    %c1_217 = arith.constant 1 : index
    %377 = arith.index_cast %93 : i32 to index
    %c0_218 = arith.constant 0 : index
    %378 = vector.load %arg4[%c0_216, %c1_217, %377, %c0_218] : memref<1x9x8x128xf32, #tpu.memory_space<vmem>>, vector<1x1x8x128xf32>
    %379 = vector.shape_cast %378 : vector<1x1x8x128xf32> to vector<8x128xf32>
    %380 = vector.broadcast %78 : f32 to vector<8x128xf32>
    %381 = arith.mulf %166, %380 : vector<8x128xf32>
    %382 = arith.addf %379, %381 : vector<8x128xf32>
    %383 = vector.broadcast %79 : f32 to vector<8x128xf32>
    %384 = arith.mulf %203, %383 : vector<8x128xf32>
    %385 = arith.addf %382, %384 : vector<8x128xf32>
    %386 = vector.broadcast %80 : f32 to vector<8x128xf32>
    %387 = arith.mulf %240, %386 : vector<8x128xf32>
    %388 = arith.addf %385, %387 : vector<8x128xf32>
    %389 = vector.broadcast %81 : f32 to vector<8x128xf32>
    %390 = arith.mulf %277, %389 : vector<8x128xf32>
    %391 = arith.addf %388, %390 : vector<8x128xf32>
    %392 = vector.broadcast %82 : f32 to vector<8x128xf32>
    %393 = arith.mulf %314, %392 : vector<8x128xf32>
    %394 = arith.addf %391, %393 : vector<8x128xf32>
    %395 = vector.broadcast %83 : f32 to vector<8x128xf32>
    %396 = arith.mulf %351, %395 : vector<8x128xf32>
    %397 = arith.addf %394, %396 : vector<8x128xf32>
    %c0_219 = arith.constant 0 : index
    %c1_220 = arith.constant 1 : index
    %398 = arith.index_cast %93 : i32 to index
    %c0_221 = arith.constant 0 : index
    %399 = vector.load %arg6[%c0_219, %c1_220, %398, %c0_221] : memref<1x3x8x128xf32, #tpu.memory_space<vmem>>, vector<1x1x8x128xf32>
    %400 = vector.shape_cast %399 : vector<1x1x8x128xf32> to vector<8x128xf32>
    %401 = vector.shape_cast %397 : vector<8x128xf32> to vector<1x1x8x128xf32>
    tpu.vector_store %arg6[%c0_219, %c1_220, %398, %c0_221], %401 {strides = array<i32>} : memref<1x3x8x128xf32, #tpu.memory_space<vmem>>, vector<1x1x8x128xf32>,
    %c0_222 = arith.constant 0 : index
    %c2_223 = arith.constant 2 : index
    %402 = arith.index_cast %93 : i32 to index
    %c0_224 = arith.constant 0 : index
    %403 = vector.load %arg4[%c0_222, %c2_223, %402, %c0_224] : memref<1x9x8x128xf32, #tpu.memory_space<vmem>>, vector<1x1x8x128xf32>
    %404 = vector.shape_cast %403 : vector<1x1x8x128xf32> to vector<8x128xf32>
    %405 = vector.broadcast %84 : f32 to vector<8x128xf32>
    %406 = arith.mulf %166, %405 : vector<8x128xf32>
    %407 = arith.addf %404, %406 : vector<8x128xf32>
    %408 = vector.broadcast %85 : f32 to vector<8x128xf32>
    %409 = arith.mulf %203, %408 : vector<8x128xf32>
    %410 = arith.addf %407, %409 : vector<8x128xf32>
    %411 = vector.broadcast %86 : f32 to vector<8x128xf32>
    %412 = arith.mulf %240, %411 : vector<8x128xf32>
    %413 = arith.addf %410, %412 : vector<8x128xf32>
    %414 = vector.broadcast %87 : f32 to vector<8x128xf32>
    %415 = arith.mulf %277, %414 : vector<8x128xf32>
    %416 = arith.addf %413, %415 : vector<8x128xf32>
    %417 = vector.broadcast %88 : f32 to vector<8x128xf32>
    %418 = arith.mulf %314, %417 : vector<8x128xf32>
    %419 = arith.addf %416, %418 : vector<8x128xf32>
    %420 = vector.broadcast %89 : f32 to vector<8x128xf32>
    %421 = arith.mulf %351, %420 : vector<8x128xf32>
    %422 = arith.addf %419, %421 : vector<8x128xf32>
    %c0_225 = arith.constant 0 : index
    %c2_226 = arith.constant 2 : index
    %423 = arith.index_cast %93 : i32 to index
    %c0_227 = arith.constant 0 : index
    %424 = vector.load %arg6[%c0_225, %c2_226, %423, %c0_227] : memref<1x3x8x128xf32, #tpu.memory_space<vmem>>, vector<1x1x8x128xf32>
    %425 = vector.shape_cast %424 : vector<1x1x8x128xf32> to vector<8x128xf32>
    %426 = vector.shape_cast %422 : vector<8x128xf32> to vector<1x1x8x128xf32>
    tpu.vector_store %arg6[%c0_225, %c2_226, %423, %c0_227], %426 {strides = array<i32>} : memref<1x3x8x128xf32, #tpu.memory_space<vmem>>, vector<1x1x8x128xf32>,
    %c1_i32_228 = arith.constant 1 : i32
    return
  }
  func.func @transform_0(%arg0: i32, %arg1: i32, %arg2: memref<6x12xf32, #tpu.memory_space<smem>>, %arg3: memref<3x6xf32, #tpu.memory_space<smem>>) -> (i32, i32, i32, i32) {
    %c0_i32 = arith.constant 0 : i32
    %c0_i32_0 = arith.constant 0 : i32
    %c0_i32_1 = arith.constant 0 : i32
    return %arg0, %c0_i32, %arg1, %c0_i32_0 : i32, i32, i32, i32
  }
  func.func @transform_1(%arg0: i32, %arg1: i32, %arg2: memref<6x12xf32, #tpu.memory_space<smem>>, %arg3: memref<3x6xf32, #tpu.memory_space<smem>>) -> (i32, i32, i32, i32) {
    %c0_i32 = arith.constant 0 : i32
    %c0_i32_0 = arith.constant 0 : i32
    %c0_i32_1 = arith.constant 0 : i32
    return %arg0, %c0_i32, %arg1, %c0_i32_0 : i32, i32, i32, i32
  }
  func.func @transform_2(%arg0: i32, %arg1: i32, %arg2: memref<6x12xf32, #tpu.memory_space<smem>>, %arg3: memref<3x6xf32, #tpu.memory_space<smem>>) -> (i32, i32, i32, i32) {
    %c0_i32 = arith.constant 0 : i32
    %c0_i32_0 = arith.constant 0 : i32
    %c0_i32_1 = arith.constant 0 : i32
    return %arg0, %c0_i32, %arg1, %c0_i32_0 : i32, i32, i32, i32
  }
}

</mosaic_0001>

<llo_original>
// kernel: tpu_custom_call.1
$region0: #{tpu_custom_call.1}
  #allocation0 [shape = 'u32[]', space=smem, size = 0x4, offset = 0x4, fixed_abs, tag = 'smem constant byte address 0x4 - core index']
  #allocation1 [shape = 'u32[144,128]{1,0:T(1,128)}', space=vmem, size = 0x12000, scoped, tag = 'internal scratch']
  #allocation2 [shape = 's32[1]{0}', space=sflag, size = 0x4, scoped, tag = 'scoped memory for tpu_custom_call.1']
  #allocation3 [shape = 'u8[4096]{0}', space=smem, size = 0x1000, scoped, tag = 'prefetched SMEM operand 0']
  #allocation4 [shape = 'u8[2048]{0}', space=smem, size = 0x800, scoped, tag = 'prefetched SMEM operand 1']
  %s0 = inlined_call_operand.hbm [shape: f32[6,12], index: 0, kind: input, shape index: {}]
  %s1 = inlined_call_operand.hbm [shape: f32[3,6], index: 1, kind: input, shape index: {}]
  %s2 = inlined_call_operand.hbm [shape: f32[2,9,8,128], index: 2, kind: input, shape index: {}]
  %s3 = inlined_call_operand.hbm [shape: f32[2,6,8,128], index: 3, kind: input, shape index: {}]
  %s4 = inlined_call_operand.hbm [shape: f32[2,3,8,128], index: 4, kind: output, shape index: {}]
  %s5 = sld [smem:[#allocation0]]
  $region49: #{tpu_custom_call.1} parent=0
    _
  %s7 = ssub.s32 1, %s5
  %s8 = scalar_select 0, %s7, %s5
  %10 = dma.hbm_to_smem %s0, 128, [#allocation3], [#allocation2]
  %12 = dma.hbm_to_smem %s1, 64, [#allocation4], [#allocation2]
  %13 = dma.done [#allocation2], 192
  %14 = sfence
  $region1: #{tpu_custom_call.1} parent=0
    #allocation5 [shape = 'u8[73728]{0}', space=vmem, size = 0x12000, scoped, tag = 'input window, operand 2']
    #allocation6 [shape = 's32[2]{0}', space=sflag, size = 0x8, scoped, tag = 'scoped memory for tpu_custom_call.1']
    #allocation7 [shape = 's32[2]{0}', space=sflag, size = 0x8, scoped, tag = 'scoped memory for tpu_custom_call.1']
    #allocation8 [shape = 'u8[49152]{0}', space=vmem, size = 0xc000, scoped, tag = 'input window, operand 3']
    #allocation9 [shape = 's32[2]{0}', space=sflag, size = 0x8, scoped, tag = 'scoped memory for tpu_custom_call.1']
    #allocation10 [shape = 'u8[24576]{0}', space=vmem, size = 0x6000, scoped, tag = 'output window, operand 0']
    %15 = vsyncpa [#allocation6], 0
    %s16 = scalar_lea.sflag [#allocation6], 1
    %17 = vsyncpa %s16, 0
    %18 = vsyncpa [#allocation9], 0
    %s19 = scalar_lea.sflag [#allocation9], 1
    %20 = vsyncpa %s19, 0
    %21 = vsyncpa [#allocation7], 0
    %s22 = scalar_lea.sflag [#allocation7], 1
    %23 = vsyncpa %s22, 0
    loop: start=0, step=1, limit=4
    $region2: #{tpu_custom_call.1} parent=1 // loop_pre_header
      _
    $region3: #{tpu_custom_call.1} parent=1 // loop_header
      %s25 = sphi 0, %s29
      %p26 = scmp.ge.s32.totalorder %s25, 4
      %s32 = sphi 0, %s44
      %s33 = sphi 0, %s40
      %s34 = sphi 0, %s32
      %s35 = sphi 0, %s33
      %s36 = sphi 0, %s34
      %s37 = sphi 0, %s35
      %s49 = sphi 0, %s51
      %s52 = sphi 0, %s49
      %s53 = sphi 0, %s52
      %s69 = sphi 0, %s53
      %s77 = sphi 0, %s79
      %s80 = sphi 0, %s77
      %s81 = sphi 0, %s80
      %s97 = sphi 0, %s81
      %s105 = sphi 0, %s107
      %s108 = sphi 0, %s105
      %s109 = sphi 0, %s108
      %s125 = sphi 0, %s109
    $region4: #{tpu_custom_call.1} parent=1 // loop_header_branch
      %28 = sbr.rel (%p26) target = $region8
    $region5: #{tpu_custom_call.1} parent=1 // loop_body
      %s30 = ssub.s32 %s25, 1
      %s31 = ssub.s32 %s25, 2
      %s38 = sadd.s32 1, %s33
      %p39 = scmp.ge.s32.totalorder %s38, 1
      %s40 = scalar_select %p39, 0, %s38
      %s41 = sadd.s32 1, %s32
      %s42 = scalar_select %p39, %s41, %s32
      %p43 = scmp.ge.s32.totalorder %s42, 2
      %s44 = scalar_select %p43, 0, %s42
      %s45 = ssub.s32 %s32, %s44
      %s46 = ssub.s32 %s33, %s40
      %s47 = sor.u32 %s45, %s46
      %p48 = scmp.eq.s32.totalorder %s47, 0
      %s50 = sadd.s32 %s49, 1
      %s51 = scalar_select %p48, %s49, %s50
      %p54 = pneg %p48
      %p55 = scmp.eq.s32.totalorder %s25, 1
      %p56 = por %p54, %p55
      %p57 = scmp.ne.s32.totalorder %s49, %s52
      %p58 = scmp.eq.s32.totalorder %s25, 0
      %p59 = por %p57, %p58
      %p60 = scmp.ne.s32.totalorder %s49, %s52
      %p61 = scmp.eq.s32.totalorder %s30, 1
      %p62 = por %p60, %p61
      %p63 = scmp.ne.s32.totalorder %s52, %s53
      %p64 = scmp.eq.s32.totalorder %s30, 0
      %p65 = por %p63, %p64
      %p66 = scmp.ne.s32.totalorder %s52, %s53
      %p67 = scmp.eq.s32.totalorder %s31, 1
      %p68 = por %p66, %p67
      %p70 = scmp.ne.s32.totalorder %s53, %s69
      %p71 = scmp.eq.s32.totalorder %s31, 0
      %p72 = por %p70, %p71
      %s73 = ssub.s32 %s32, %s44
      %s74 = ssub.s32 %s33, %s40
      %s75 = sor.u32 %s73, %s74
      %p76 = scmp.eq.s32.totalorder %s75, 0
      %s78 = sadd.s32 %s77, 1
      %s79 = scalar_select %p76, %s77, %s78
      %p82 = pneg %p76
      %p83 = scmp.eq.s32.totalorder %s25, 1
      %p84 = por %p82, %p83
      %p85 = scmp.ne.s32.totalorder %s77, %s80
      %p86 = scmp.eq.s32.totalorder %s25, 0
      %p87 = por %p85, %p86
      %p88 = scmp.ne.s32.totalorder %s77, %s80
      %p89 = scmp.eq.s32.totalorder %s30, 1
      %p90 = por %p88, %p89
      %p91 = scmp.ne.s32.totalorder %s80, %s81
      %p92 = scmp.eq.s32.totalorder %s30, 0
      %p93 = por %p91, %p92
      %p94 = scmp.ne.s32.totalorder %s80, %s81
      %p95 = scmp.eq.s32.totalorder %s31, 1
      %p96 = por %p94, %p95
      %p98 = scmp.ne.s32.totalorder %s81, %s97
      %p99 = scmp.eq.s32.totalorder %s31, 0
      %p100 = por %p98, %p99
      %s101 = ssub.s32 %s32, %s44
      %s102 = ssub.s32 %s33, %s40
      %s103 = sor.u32 %s101, %s102
      %p104 = scmp.eq.s32.totalorder %s103, 0
      %s106 = sadd.s32 %s105, 1
      %s107 = scalar_select %p104, %s105, %s106
      %p110 = pneg %p104
      %p111 = scmp.eq.s32.totalorder %s25, 1
      %p112 = por %p110, %p111
      %p113 = scmp.ne.s32.totalorder %s105, %s108
      %p114 = scmp.eq.s32.totalorder %s25, 0
      %p115 = por %p113, %p114
      %p116 = scmp.ne.s32.totalorder %s105, %s108
      %p117 = scmp.eq.s32.totalorder %s30, 1
      %p118 = por %p116, %p117
      %p119 = scmp.ne.s32.totalorder %s108, %s109
      %p120 = scmp.eq.s32.totalorder %s30, 0
      %p121 = por %p119, %p120
      %p122 = scmp.ne.s32.totalorder %s108, %s109
      %p123 = scmp.eq.s32.totalorder %s31, 1
      %p124 = por %p122, %p123
      %p126 = scmp.ne.s32.totalorder %s109, %s125
      %p127 = scmp.eq.s32.totalorder %s31, 0
      %p128 = por %p126, %p127
      %p129 = scmp.le.s32.totalorder 1, %s25
      %p130 = scmp.lt.s32.totalorder %s25, 3
      %p131 = pnand %p129, %p130
      %p132 = pneg %p131
      // Predicated region
      $region9: #{tpu_custom_call.1} parent=5 // pred_check
        _
      $region10: #{tpu_custom_call.1} parent=5 // pred_check_branch
        %134 = sbr.rel (%p131) target = $region12
      $region11: #{tpu_custom_call.1} parent=5 // pred_region
        %s135 = ssub.s32 %s25, 1
      $region12: #{tpu_custom_call.1} parent=5 // pred_fallthru
        _
      %p136 = scmp.lt.s32.totalorder %s25, 2
      // Predicated region
      $region13: #{tpu_custom_call.1} parent=5 // pred_check
        %p137 = pneg %p136
      $region14: #{tpu_custom_call.1} parent=5 // pred_check_branch
        %139 = sbr.rel (%p137) target = $region16
      $region15: #{tpu_custom_call.1} parent=5 // pred_region
        // Predicated region
        $region17: #{tpu_custom_call.1} parent=15 // pred_check
          %p140 = pneg %p59
        $region18: #{tpu_custom_call.1} parent=15 // pred_check_branch
          %142 = sbr.rel (%p140) target = $region20
        $region19: #{tpu_custom_call.1} parent=15 // pred_region
          %s143 = sand.u32 %s49, 1
          %s144 = scalar_lea.sflag [#allocation6], %s143
          %s145 = sand.u32 %s49, 1
          %s146 = smul.addr %s145, 72
          %s147 = scalar_lea.vmem [#allocation5], %s146
          %s149 = ssub.s32 1152, 1152
          %150 = vsyncadd %s144, %s149
          %s151 = smul.addr %s32, 9
          %s152 = sadd.s32 %s33, %s151
          %s153 = smul.addr %s152, 128
          %s154 = scalar_lea.hbm %s2, %s153
          %s155 = sshll.u32 %s147, 4
          %s156 = int_to_ptr.vmem [resolvable:$true] %s155
          %161 = dma.hbm_to_vmem [thread:$0]  %s154, 1152, %s156, %s144, 128, 128, 8
        $region20: #{tpu_custom_call.1} parent=15 // pred_fallthru
          _
        // Predicated region
        $region21: #{tpu_custom_call.1} parent=15 // pred_check
          %p162 = pneg %p87
        $region22: #{tpu_custom_call.1} parent=15 // pred_check_branch
          %164 = sbr.rel (%p162) target = $region24
        $region23: #{tpu_custom_call.1} parent=15 // pred_region
          %s165 = sand.u32 %s77, 1
          %s166 = scalar_lea.sflag [#allocation9], %s165
          %s167 = sand.u32 %s77, 1
          %s168 = smul.addr %s167, 48
          %s169 = scalar_lea.vmem [#allocation8], %s168
          %s171 = ssub.s32 768, 768
          %172 = vsyncadd %s166, %s171
          %s173 = smul.addr %s32, 6
          %s174 = sadd.s32 %s33, %s173
          %s175 = smul.addr %s174, 128
          %s176 = scalar_lea.hbm %s3, %s175
          %s177 = sshll.u32 %s169, 4
          %s178 = int_to_ptr.vmem [resolvable:$true] %s177
          %183 = dma.hbm_to_vmem [thread:$0]  %s176, 768, %s178, %s166, 128, 128, 8
        $region24: #{tpu_custom_call.1} parent=15 // pred_fallthru
          _
      $region16: #{tpu_custom_call.1} parent=5 // pred_fallthru
        _
      %p184 = scmp.le.s32.totalorder 1, %s25
      %p185 = scmp.lt.s32.totalorder %s25, 3
      %p186 = pnand %p184, %p185
      %p187 = pneg %p186
      // Predicated region
      $region25: #{tpu_custom_call.1} parent=5 // pred_check
        _
      $region26: #{tpu_custom_call.1} parent=5 // pred_check_branch
        %189 = sbr.rel (%p186) target = $region28
      $region27: #{tpu_custom_call.1} parent=5 // pred_region
        %s190 = ssub.s32 %s25, 1
        %s191 = sand.u32 %s52, 1
        %s192 = scalar_lea.sflag [#allocation6], %s191
        %s193 = sand.u32 %s52, 1
        %s194 = smul.addr %s193, 72
        %s195 = scalar_lea.vmem [#allocation5], %s194
        // Predicated region
        $region29: #{tpu_custom_call.1} parent=27 // pred_check
          %p196 = pneg %p65
        $region30: #{tpu_custom_call.1} parent=27 // pred_check_branch
          %198 = sbr.rel (%p196) target = $region32
        $region31: #{tpu_custom_call.1} parent=27 // pred_region
          %199 = dma.done %s192, 1152
        $region32: #{tpu_custom_call.1} parent=27 // pred_fallthru
          _
        %s200 = sand.u32 %s80, 1
        %s201 = scalar_lea.sflag [#allocation9], %s200
        %s202 = sand.u32 %s80, 1
        %s203 = smul.addr %s202, 48
        %s204 = scalar_lea.vmem [#allocation8], %s203
        // Predicated region
        $region33: #{tpu_custom_call.1} parent=27 // pred_check
          %p205 = pneg %p93
        $region34: #{tpu_custom_call.1} parent=27 // pred_check_branch
          %207 = sbr.rel (%p205) target = $region36
        $region35: #{tpu_custom_call.1} parent=27 // pred_region
          %208 = dma.done %s201, 768
        $region36: #{tpu_custom_call.1} parent=27 // pred_fallthru
          _
        %s209 = sand.u32 %s52, 1
        %s210 = scalar_lea.sflag [#allocation6], %s209
        %s211 = sand.u32 %s52, 1
        %s212 = smul.addr %s211, 72
        %s213 = scalar_lea.vmem [#allocation5], %s212
        %p214 = pneg %p65
        %p215 = pneg %p62
        %s216 = sand.u32 %s80, 1
        %s217 = scalar_lea.sflag [#allocation9], %s216
        %s218 = sand.u32 %s80, 1
        %s219 = smul.addr %s218, 48
        %s220 = scalar_lea.vmem [#allocation8], %s219
        %p221 = pneg %p93
        %p222 = pneg %p90
        %p223 = pneg %p121
        %p224 = pneg %p118
        %s225 = sand.u32 %s108, 1
        %s226 = scalar_lea.sflag [#allocation7], %s225
        %s227 = sand.u32 %s108, 1
        %s228 = smul.addr %s227, 24
        %s229 = scalar_lea.vmem [#allocation10], %s228
        %s230 = sld [smem:[#allocation3]]
        %s231 = sld [smem:[#allocation3 + $0x1]]
        %s232 = sld [smem:[#allocation3 + $0x2]]
        %s233 = sld [smem:[#allocation3 + $0x3]]
        %s234 = sld [smem:[#allocation3 + $0x4]]
        %s235 = sld [smem:[#allocation3 + $0x5]]
        %s236 = sld [smem:[#allocation3 + $0x6]]
        %s237 = sld [smem:[#allocation3 + $0x7]]
        %s238 = sld [smem:[#allocation3 + $0x8]]
        %s239 = sld [smem:[#allocation3 + $0x9]]
        %s240 = sld [smem:[#allocation3 + $0xa]]
        %s241 = sld [smem:[#allocation3 + $0xb]]
        %s242 = sld [smem:[#allocation3 + $0x80]]
        %s243 = sld [smem:[#allocation3 + $0x81]]
        %s244 = sld [smem:[#allocation3 + $0x82]]
        %s245 = sld [smem:[#allocation3 + $0x83]]
        %s246 = sld [smem:[#allocation3 + $0x84]]
        %s247 = sld [smem:[#allocation3 + $0x85]]
        %s248 = sld [smem:[#allocation3 + $0x86]]
        %s249 = sld [smem:[#allocation3 + $0x87]]
        %s250 = sld [smem:[#allocation3 + $0x88]]
        %s251 = sld [smem:[#allocation3 + $0x89]]
        %s252 = sld [smem:[#allocation3 + $0x8a]]
        %s253 = sld [smem:[#allocation3 + $0x8b]]
        %s254 = sld [smem:[#allocation3 + $0x100]]
        %s255 = sld [smem:[#allocation3 + $0x101]]
        %s256 = sld [smem:[#allocation3 + $0x102]]
        %s257 = sld [smem:[#allocation3 + $0x103]]
        %s258 = sld [smem:[#allocation3 + $0x104]]
        %s259 = sld [smem:[#allocation3 + $0x105]]
        %s260 = sld [smem:[#allocation3 + $0x106]]
        %s261 = sld [smem:[#allocation3 + $0x107]]
        %s262 = sld [smem:[#allocation3 + $0x108]]
        %s263 = sld [smem:[#allocation3 + $0x109]]
        %s264 = sld [smem:[#allocation3 + $0x10a]]
        %s265 = sld [smem:[#allocation3 + $0x10b]]
        %s266 = sld [smem:[#allocation3 + $0x180]]
        %s267 = sld [smem:[#allocation3 + $0x181]]
        %s268 = sld [smem:[#allocation3 + $0x182]]
        %s269 = sld [smem:[#allocation3 + $0x183]]
        %s270 = sld [smem:[#allocation3 + $0x184]]
        %s271 = sld [smem:[#allocation3 + $0x185]]
        %s272 = sld [smem:[#allocation3 + $0x186]]
        %s273 = sld [smem:[#allocation3 + $0x187]]
        %s274 = sld [smem:[#allocation3 + $0x188]]
        %s275 = sld [smem:[#allocation3 + $0x189]]
        %s276 = sld [smem:[#allocation3 + $0x18a]]
        %s277 = sld [smem:[#allocation3 + $0x18b]]
        %s278 = sld [smem:[#allocation3 + $0x200]]
        %s279 = sld [smem:[#allocation3 + $0x201]]
        %s280 = sld [smem:[#allocation3 + $0x202]]
        %s281 = sld [smem:[#allocation3 + $0x203]]
        %s282 = sld [smem:[#allocation3 + $0x204]]
        %s283 = sld [smem:[#allocation3 + $0x205]]
        %s284 = sld [smem:[#allocation3 + $0x206]]
        %s285 = sld [smem:[#allocation3 + $0x207]]
        %s286 = sld [smem:[#allocation3 + $0x208]]
        %s287 = sld [smem:[#allocation3 + $0x209]]
        %s288 = sld [smem:[#allocation3 + $0x20a]]
        %s289 = sld [smem:[#allocation3 + $0x20b]]
        %s290 = sld [smem:[#allocation3 + $0x280]]
        %s291 = sld [smem:[#allocation3 + $0x281]]
        %s292 = sld [smem:[#allocation3 + $0x282]]
        %s293 = sld [smem:[#allocation3 + $0x283]]
        %s294 = sld [smem:[#allocation3 + $0x284]]
        %s295 = sld [smem:[#allocation3 + $0x285]]
        %s296 = sld [smem:[#allocation3 + $0x286]]
        %s297 = sld [smem:[#allocation3 + $0x287]]
        %s298 = sld [smem:[#allocation3 + $0x288]]
        %s299 = sld [smem:[#allocation3 + $0x289]]
        %s300 = sld [smem:[#allocation3 + $0x28a]]
        %s301 = sld [smem:[#allocation3 + $0x28b]]
        %s302 = sld [smem:[#allocation4]]
        %s303 = sld [smem:[#allocation4 + $0x1]]
        %s304 = sld [smem:[#allocation4 + $0x2]]
        %s305 = sld [smem:[#allocation4 + $0x3]]
        %s306 = sld [smem:[#allocation4 + $0x4]]
        %s307 = sld [smem:[#allocation4 + $0x5]]
        %s308 = sld [smem:[#allocation4 + $0x80]]
        %s309 = sld [smem:[#allocation4 + $0x81]]
        %s310 = sld [smem:[#allocation4 + $0x82]]
        %s311 = sld [smem:[#allocation4 + $0x83]]
        %s312 = sld [smem:[#allocation4 + $0x84]]
        %s313 = sld [smem:[#allocation4 + $0x85]]
        %s314 = sld [smem:[#allocation4 + $0x100]]
        %s315 = sld [smem:[#allocation4 + $0x101]]
        %s316 = sld [smem:[#allocation4 + $0x102]]
        %s317 = sld [smem:[#allocation4 + $0x103]]
        %s318 = sld [smem:[#allocation4 + $0x104]]
        %s319 = sld [smem:[#allocation4 + $0x105]]
        %s320 = sadd.s32 0, 24
        %s321 = scalar_lea.vmem %s195, %s320 [#allocation5]
        %v322 = vld [vmem:[%s321] sm:$0xff]
        %s323 = sadd.s32 0, 32
        %s324 = scalar_lea.vmem %s195, %s323 [#allocation5]
        %v325 = vld [vmem:[%s324] sm:$0xff]
        %s326 = sadd.s32 0, 40
        %s327 = scalar_lea.vmem %s195, %s326 [#allocation5]
        %v328 = vld [vmem:[%s327] sm:$0xff]
        %s329 = sadd.s32 0, 48
        %s330 = scalar_lea.vmem %s195, %s329 [#allocation5]
        %v331 = vld [vmem:[%s330] sm:$0xff]
        %s332 = sadd.s32 0, 56
        %s333 = scalar_lea.vmem %s195, %s332 [#allocation5]
        %v334 = vld [vmem:[%s333] sm:$0xff]
        %s335 = sadd.s32 0, 64
        %s336 = scalar_lea.vmem %s195, %s335 [#allocation5]
        %v337 = vld [vmem:[%s336] sm:$0xff]
        %v338 = vld [vmem:[%s204] sm:$0xff]
        %s339 = sadd.s32 0, 8
        %s340 = scalar_lea.vmem %s204, %s339 [#allocation8]
        %v341 = vld [vmem:[%s340] sm:$0xff]
        %s342 = sadd.s32 0, 16
        %s343 = scalar_lea.vmem %s204, %s342 [#allocation8]
        %v344 = vld [vmem:[%s343] sm:$0xff]
        %s345 = scalar_lea.vmem %s204, %s320 [#allocation8]
        %v346 = vld [vmem:[%s345] sm:$0xff]
        %s347 = scalar_lea.vmem %s204, %s323 [#allocation8]
        %v348 = vld [vmem:[%s347] sm:$0xff]
        %s349 = scalar_lea.vmem %s204, %s326 [#allocation8]
        %v350 = vld [vmem:[%s349] sm:$0xff]
        %v351 = vstv %s230
        %v352 = vmul.f32 %v322, %v351
        %v353 = vstv %s231
        %v354 = vmul.f32 %v325, %v353
        %v355 = vadd.f32 %v352, %v354
        %v356 = vstv %s232
        %v357 = vmul.f32 %v328, %v356
        %v358 = vadd.f32 %v355, %v357
        %v359 = vstv %s233
        %v360 = vmul.f32 %v331, %v359
        %v361 = vadd.f32 %v358, %v360
        %v362 = vstv %s234
        %v363 = vmul.f32 %v334, %v362
        %v364 = vadd.f32 %v361, %v363
        %v365 = vstv %s235
        %v366 = vmul.f32 %v337, %v365
        %v367 = vadd.f32 %v364, %v366
        %v368 = vstv %s236
        %v369 = vmul.f32 %v338, %v368
        %v370 = vadd.f32 %v367, %v369
        %v371 = vstv %s237
        %v372 = vmul.f32 %v341, %v371
        %v373 = vadd.f32 %v370, %v372
        %v374 = vstv %s238
        %v375 = vmul.f32 %v344, %v374
        %v376 = vadd.f32 %v373, %v375
        %v377 = vstv %s239
        %v378 = vmul.f32 %v346, %v377
        %v379 = vadd.f32 %v376, %v378
        %v380 = vstv %s240
        %v381 = vmul.f32 %v348, %v380
        %v382 = vadd.f32 %v379, %v381
        %v383 = vstv %s241
        %v384 = vmul.f32 %v350, %v383
        %v385 = vadd.f32 %v382, %v384
        %v386 = vmax.f32 %v385, 0.0
        %v387 = vstv %s242
        %v388 = vmul.f32 %v322, %v387
        %v389 = vstv %s243
        %v390 = vmul.f32 %v325, %v389
        %v391 = vadd.f32 %v388, %v390
        %v392 = vstv %s244
        %v393 = vmul.f32 %v328, %v392
        %v394 = vadd.f32 %v391, %v393
        %v395 = vstv %s245
        %v396 = vmul.f32 %v331, %v395
        %v397 = vadd.f32 %v394, %v396
        %v398 = vstv %s246
        %v399 = vmul.f32 %v334, %v398
        %v400 = vadd.f32 %v397, %v399
        %v401 = vstv %s247
        %v402 = vmul.f32 %v337, %v401
        %v403 = vadd.f32 %v400, %v402
        %v404 = vstv %s248
        %v405 = vmul.f32 %v338, %v404
        %v406 = vadd.f32 %v403, %v405
        %v407 = vstv %s249
        %v408 = vmul.f32 %v341, %v407
        %v409 = vadd.f32 %v406, %v408
        %v410 = vstv %s250
        %v411 = vmul.f32 %v344, %v410
        %v412 = vadd.f32 %v409, %v411
        %v413 = vstv %s251
        %v414 = vmul.f32 %v346, %v413
        %v415 = vadd.f32 %v412, %v414
        %v416 = vstv %s252
        %v417 = vmul.f32 %v348, %v416
        %v418 = vadd.f32 %v415, %v417
        %v419 = vstv %s253
        %v420 = vmul.f32 %v350, %v419
        %v421 = vadd.f32 %v418, %v420
        %v422 = vmax.f32 %v421, 0.0
        %v423 = vstv %s254
        %v424 = vmul.f32 %v322, %v423
        %v425 = vstv %s255
        %v426 = vmul.f32 %v325, %v425
        %v427 = vadd.f32 %v424, %v426
        %v428 = vstv %s256
        %v429 = vmul.f32 %v328, %v428
        %v430 = vadd.f32 %v427, %v429
        %v431 = vstv %s257
        %v432 = vmul.f32 %v331, %v431
        %v433 = vadd.f32 %v430, %v432
        %v434 = vstv %s258
        %v435 = vmul.f32 %v334, %v434
        %v436 = vadd.f32 %v433, %v435
        %v437 = vstv %s259
        %v438 = vmul.f32 %v337, %v437
        %v439 = vadd.f32 %v436, %v438
        %v440 = vstv %s260
        %v441 = vmul.f32 %v338, %v440
        %v442 = vadd.f32 %v439, %v441
        %v443 = vstv %s261
        %v444 = vmul.f32 %v341, %v443
        %v445 = vadd.f32 %v442, %v444
        %v446 = vstv %s262
        %v447 = vmul.f32 %v344, %v446
        %v448 = vadd.f32 %v445, %v447
        %v449 = vstv %s263
        %v450 = vmul.f32 %v346, %v449
        %v451 = vadd.f32 %v448, %v450
        %v452 = vstv %s264
        %v453 = vmul.f32 %v348, %v452
        %v454 = vadd.f32 %v451, %v453
        %v455 = vstv %s265
        %v456 = vmul.f32 %v350, %v455
        %v457 = vadd.f32 %v454, %v456
        %v458 = vmax.f32 %v457, 0.0
        %v459 = vstv %s266
        %v460 = vmul.f32 %v322, %v459
        %v461 = vstv %s267
        %v462 = vmul.f32 %v325, %v461
        %v463 = vadd.f32 %v460, %v462
        %v464 = vstv %s268
        %v465 = vmul.f32 %v328, %v464
        %v466 = vadd.f32 %v463, %v465
        %v467 = vstv %s269
        %v468 = vmul.f32 %v331, %v467
        %v469 = vadd.f32 %v466, %v468
        %v470 = vstv %s270
        %v471 = vmul.f32 %v334, %v470
        %v472 = vadd.f32 %v469, %v471
        %v473 = vstv %s271
        %v474 = vmul.f32 %v337, %v473
        %v475 = vadd.f32 %v472, %v474
        %v476 = vstv %s272
        %v477 = vmul.f32 %v338, %v476
        %v478 = vadd.f32 %v475, %v477
        %v479 = vstv %s273
        %v480 = vmul.f32 %v341, %v479
        %v481 = vadd.f32 %v478, %v480
        %v482 = vstv %s274
        %v483 = vmul.f32 %v344, %v482
        %v484 = vadd.f32 %v481, %v483
        %v485 = vstv %s275
        %v486 = vmul.f32 %v346, %v485
        %v487 = vadd.f32 %v484, %v486
        %v488 = vstv %s276
        %v489 = vmul.f32 %v348, %v488
        %v490 = vadd.f32 %v487, %v489
        %v491 = vstv %s277
        %v492 = vmul.f32 %v350, %v491
        %v493 = vadd.f32 %v490, %v492
        %v494 = vmax.f32 %v493, 0.0
        %v495 = vstv %s278
        %v496 = vmul.f32 %v322, %v495
        %v497 = vstv %s279
        %v498 = vmul.f32 %v325, %v497
        %v499 = vadd.f32 %v496, %v498
        %v500 = vstv %s280
        %v501 = vmul.f32 %v328, %v500
        %v502 = vadd.f32 %v499, %v501
        %v503 = vstv %s281
        %v504 = vmul.f32 %v331, %v503
        %v505 = vadd.f32 %v502, %v504
        %v506 = vstv %s282
        %v507 = vmul.f32 %v334, %v506
        %v508 = vadd.f32 %v505, %v507
        %v509 = vstv %s283
        %v510 = vmul.f32 %v337, %v509
        %v511 = vadd.f32 %v508, %v510
        %v512 = vstv %s284
        %v513 = vmul.f32 %v338, %v512
        %v514 = vadd.f32 %v511, %v513
        %v515 = vstv %s285
        %v516 = vmul.f32 %v341, %v515
        %v517 = vadd.f32 %v514, %v516
        %v518 = vstv %s286
        %v519 = vmul.f32 %v344, %v518
        %v520 = vadd.f32 %v517, %v519
        %v521 = vstv %s287
        %v522 = vmul.f32 %v346, %v521
        %v523 = vadd.f32 %v520, %v522
        %v524 = vstv %s288
        %v525 = vmul.f32 %v348, %v524
        %v526 = vadd.f32 %v523, %v525
        %v527 = vstv %s289
        %v528 = vmul.f32 %v350, %v527
        %v529 = vadd.f32 %v526, %v528
        %v530 = vmax.f32 %v529, 0.0
        %v531 = vstv %s290
        %v532 = vmul.f32 %v322, %v531
        %v533 = vstv %s291
        %v534 = vmul.f32 %v325, %v533
        %v535 = vadd.f32 %v532, %v534
        %v536 = vstv %s292
        %v537 = vmul.f32 %v328, %v536
        %v538 = vadd.f32 %v535, %v537
        %v539 = vstv %s293
        %v540 = vmul.f32 %v331, %v539
        %v541 = vadd.f32 %v538, %v540
        %v542 = vstv %s294
        %v543 = vmul.f32 %v334, %v542
        %v544 = vadd.f32 %v541, %v543
        %v545 = vstv %s295
        %v546 = vmul.f32 %v337, %v545
        %v547 = vadd.f32 %v544, %v546
        %v548 = vstv %s296
        %v549 = vmul.f32 %v338, %v548
        %v550 = vadd.f32 %v547, %v549
        %v551 = vstv %s297
        %v552 = vmul.f32 %v341, %v551
        %v553 = vadd.f32 %v550, %v552
        %v554 = vstv %s298
        %v555 = vmul.f32 %v344, %v554
        %v556 = vadd.f32 %v553, %v555
        %v557 = vstv %s299
        %v558 = vmul.f32 %v346, %v557
        %v559 = vadd.f32 %v556, %v558
        %v560 = vstv %s300
        %v561 = vmul.f32 %v348, %v560
        %v562 = vadd.f32 %v559, %v561
        %v563 = vstv %s301
        %v564 = vmul.f32 %v350, %v563
        %v565 = vadd.f32 %v562, %v564
        %v566 = vmax.f32 %v565, 0.0
        %v567 = vld [vmem:[%s195] sm:$0xff]
        %v568 = vstv %s302
        %v569 = vmul.f32 %v386, %v568
        %v570 = vadd.f32 %v567, %v569
        %v571 = vstv %s303
        %v572 = vmul.f32 %v422, %v571
        %v573 = vadd.f32 %v570, %v572
        %v574 = vstv %s304
        %v575 = vmul.f32 %v458, %v574
        %v576 = vadd.f32 %v573, %v575
        %v577 = vstv %s305
        %v578 = vmul.f32 %v494, %v577
        %v579 = vadd.f32 %v576, %v578
        %v580 = vstv %s306
        %v581 = vmul.f32 %v530, %v580
        %v582 = vadd.f32 %v579, %v581
        %v583 = vstv %s307
        %v584 = vmul.f32 %v566, %v583
        %v585 = vadd.f32 %v582, %v584
        %586 = vst [vmem:[%s229] sm:$0xff] %v585
        %s587 = scalar_lea.vmem %s195, %s339 [#allocation5]
        %v588 = vld [vmem:[%s587] sm:$0xff]
        %v589 = vstv %s308
        %v590 = vmul.f32 %v386, %v589
        %v591 = vadd.f32 %v588, %v590
        %v592 = vstv %s309
        %v593 = vmul.f32 %v422, %v592
        %v594 = vadd.f32 %v591, %v593
        %v595 = vstv %s310
        %v596 = vmul.f32 %v458, %v595
        %v597 = vadd.f32 %v594, %v596
        %v598 = vstv %s311
        %v599 = vmul.f32 %v494, %v598
        %v600 = vadd.f32 %v597, %v599
        %v601 = vstv %s312
        %v602 = vmul.f32 %v530, %v601
        %v603 = vadd.f32 %v600, %v602
        %v604 = vstv %s313
        %v605 = vmul.f32 %v566, %v604
        %v606 = vadd.f32 %v603, %v605
        %s607 = scalar_lea.vmem %s229, %s339 [#allocation10]
        %608 = vst [vmem:[%s607] sm:$0xff] %v606
        %s609 = scalar_lea.vmem %s195, %s342 [#allocation5]
        %v610 = vld [vmem:[%s609] sm:$0xff]
        %v611 = vstv %s314
        %v612 = vmul.f32 %v386, %v611
        %v613 = vadd.f32 %v610, %v612
        %v614 = vstv %s315
        %v615 = vmul.f32 %v422, %v614
        %v616 = vadd.f32 %v613, %v615
        %v617 = vstv %s316
        %v618 = vmul.f32 %v458, %v617
        %v619 = vadd.f32 %v616, %v618
        %v620 = vstv %s317
        %v621 = vmul.f32 %v494, %v620
        %v622 = vadd.f32 %v619, %v621
        %v623 = vstv %s318
        %v624 = vmul.f32 %v530, %v623
        %v625 = vadd.f32 %v622, %v624
        %v626 = vstv %s319
        %v627 = vmul.f32 %v566, %v626
        %v628 = vadd.f32 %v625, %v627
        %s629 = scalar_lea.vmem %s229, %s342 [#allocation10]
        %630 = vst [vmem:[%s629] sm:$0xff] %v628
        %s631 = sand.u32 %s108, 1
        %s632 = scalar_lea.sflag [#allocation7], %s631
        %s633 = sand.u32 %s108, 1
        %s634 = smul.addr %s633, 24
        %s635 = scalar_lea.vmem [#allocation10], %s634
        // Predicated region
        $region37: #{tpu_custom_call.1} parent=27 // pred_check
          %p636 = pneg %p118
        $region38: #{tpu_custom_call.1} parent=27 // pred_check_branch
          %638 = sbr.rel (%p636) target = $region40
        $region39: #{tpu_custom_call.1} parent=27 // pred_region
          %s640 = ssub.s32 384, 384
          %641 = vsyncadd %s632, %s640
          %s642 = smul.addr %s34, 3
          %s643 = sadd.s32 %s35, %s642
          %s644 = smul.addr %s643, 128
          %s645 = scalar_lea.hbm %s4, %s644
          %s646 = sshll.u32 %s635, 4
          %s647 = int_to_ptr.vmem [resolvable:$true] %s646
          %652 = dma.vmem_to_hbm [thread:$0]  %s647, 384, %s645, %s632, 128, 128, 8
        $region40: #{tpu_custom_call.1} parent=27 // pred_fallthru
          _
      $region28: #{tpu_custom_call.1} parent=5 // pred_fallthru
        _
      %p653 = scmp.le.s32.totalorder 2, %s25
      // Predicated region
      $region41: #{tpu_custom_call.1} parent=5 // pred_check
        %p654 = pneg %p653
      $region42: #{tpu_custom_call.1} parent=5 // pred_check_branch
        %656 = sbr.rel (%p654) target = $region44
      $region43: #{tpu_custom_call.1} parent=5 // pred_region
        %s657 = ssub.s32 %s25, 2
        // Predicated region
        $region45: #{tpu_custom_call.1} parent=43 // pred_check
          %p658 = pneg %p124
        $region46: #{tpu_custom_call.1} parent=43 // pred_check_branch
          %660 = sbr.rel (%p658) target = $region48
        $region47: #{tpu_custom_call.1} parent=43 // pred_region
          %s661 = sand.u32 %s109, 1
          %s662 = scalar_lea.sflag [#allocation7], %s661
          %s663 = sand.u32 %s109, 1
          %s664 = smul.addr %s663, 24
          %s665 = scalar_lea.vmem [#allocation10], %s664
          %666 = dma.done %s662, 384
        $region48: #{tpu_custom_call.1} parent=43 // pred_fallthru
          _
      $region44: #{tpu_custom_call.1} parent=5 // pred_fallthru
        _
    $region6: #{tpu_custom_call.1} parent=1 // loop_footer
      %s29 = sadd.s32 1, %s25
    $region7: #{tpu_custom_call.1} parent=1 // loop_footer_branch
      %24 = sbr.rel target = $region3
    $region8: #{tpu_custom_call.1} parent=1 // loop_exit
      _
    %667 = vsyncpa [#allocation6], 1
    %s668 = scalar_lea.sflag [#allocation6], 1
    %669 = vsyncpa %s668, 1
    %670 = vsyncpa [#allocation9], 1
    %s671 = scalar_lea.sflag [#allocation9], 1
    %672 = vsyncpa %s671, 1
    %673 = vsyncpa [#allocation7], 1
    %s674 = scalar_lea.sflag [#allocation7], 1
    %675 = vsyncpa %s674, 1

</llo_original>
